<compile_context>
chip_gen: v7x
topology: tpu7x:2x2x1
jax: 0.10.0
libtpu: 0.0.40
codegen_flags: <defaults>
</compile_context>

<pallas_src>
import jax
import jax.numpy as jnp
from jax.experimental import pallas as pl
from jax.experimental.pallas import tpu as pltpu


def _make_combined_loss_kernel(batch, tile_rows, tiles_per_core):
    """Builds the kernel with static batch size / tile size / per-core tile count baked in."""
    inv_b = 1.0 / float(batch)

    def kernel(f_ref, c_ref, lab_ref, out_ref, acc_ref):
        core = pl.program_id(0)
        step = pl.program_id(1)

        @pl.when(step == 0)
        def _init():
            acc_ref[...] = jnp.zeros_like(acc_ref)

        f = f_ref[...].astype(jnp.float32)            # (TB, C) factual_fused
        c = c_ref[...].astype(jnp.float32)            # (TB, C) counterfactual_fused
        lab = lab_ref[...]                            # (TB, 1) int32 class indices

        n_rows, n_cls = f.shape
        col = jax.lax.broadcasted_iota(jnp.int32, (n_rows, n_cls), 1)
        is_lab = col == lab                           # (TB, C) bool

        # --- cross-entropy logsumexp terms, computed directly on f and c (no concat copies) ---
        m_f = jnp.max(f, axis=-1, keepdims=True)
        lse_f = m_f + jnp.log(jnp.sum(jnp.exp(f - m_f), axis=-1, keepdims=True))   # (TB, 1)
        m_c = jnp.max(c, axis=-1, keepdims=True)
        lse_c = m_c + jnp.log(jnp.sum(jnp.exp(c - m_c), axis=-1, keepdims=True))   # (TB, 1)

        # --- one fused "picked logit" reduction covering both CE terms (no onehot multiply) ---
        picked = jnp.sum(jnp.where(is_lab, f + c, 0.0), axis=-1, keepdims=True)    # (TB, 1)

        # --- KL(f || c) row sums with xlogy semantics (f == 0 contributes 0) ---
        log_f = jnp.log(f)
        log_c = jnp.log(c)
        kl_row = jnp.sum(jnp.where(f > 0, f * (log_f - log_c), 0.0),
                         axis=-1, keepdims=True)                                   # (TB, 1)

        # --- mask rows beyond the true batch (ragged last tile / redundant clamped tile).   ---
        # NaN-safe: jnp.where selects 0 even if the garbage rows produced inf / NaN above.
        tile_idx = core * tiles_per_core + step
        row = tile_idx * tile_rows + jax.lax.broadcasted_iota(jnp.int32, (n_rows, 1), 0)
        per_row = lse_f + lse_c - picked + kl_row                                   # (TB, 1)
        acc_ref[...] += jnp.where(row < batch, per_row, 0.0)

        @pl.when(step == pl.num_programs(1) - 1)
        def _finalize():
            # Cross-sublane reduce + scalar scale happen once per core, not every step.
            out_ref[...] = (jnp.sum(acc_ref[...]) * inv_b).reshape(1, 1, 1)

    return kernel


def _choose_tile_rows(batch, n_cls):
    """Generation-aware tile-row choice + explicit scoped-VMEM limit."""
    try:
        vmem_cap = int(pltpu.get_tpu_info().vmem_capacity_bytes)
    except Exception:  # e.g. interpret mode / unknown chip
        vmem_cap = 64 * 1024 * 1024
    # Conservative per-core working-set target (fits v5e/v6e 128 MiB and v7x's smaller VMEM,
    # even when the grid is split across both v7x TensorCores).
    vmem_budget = min(vmem_cap // 4, 32 * 1024 * 1024)
    # Per-row bytes: f + c double-buffered (2 arrays x 2 buffers), ~8 (TB, C) f32 temporaries
    # inside the kernel, lane-padded (TB, 1) labels (x2 buffers) and the (TB, 1) accumulator.
    bytes_per_row = (2 * 2 + 8) * n_cls * 4 + 2 * 128 * 4 + 128 * 4
    tb = min(max(vmem_budget // bytes_per_row, 8), 8192, batch)
    if tb < batch:
        tb = max(8, (tb // 8) * 8)            # sublane-aligned when not the full batch
    vmem_limit = min(vmem_cap // 2, vmem_budget + (16 << 20))
    return int(tb), int(vmem_limit)


def combined_loss(factual_fused, counterfactual_fused, predictions, labels):
    """Pallas implementation of CombinedLoss.forward. `predictions` is unused (as in the spec)."""
    del predictions  # unused in the reference module's forward as well
    B, C = factual_fused.shape

    tb, vmem_limit = _choose_tile_rows(B, C)
    nt = -(-B // tb)                # number of batch tiles (ragged last tile allowed, no pad)
    half = (nt + 1) // 2            # tiles per core for the 2-way (v7x megacore) split
    grid = (2, half)

    labels2d = labels.astype(jnp.int32).reshape(B, 1)

    # Clamp the block index so the (possibly redundant) last tile of the second core and the
    # ragged last tile never issue an out-of-bounds DMA; their rows are masked in-kernel.
    def _in_map(c, i):
        return (jnp.minimum(c * half + i, nt - 1), 0)

    kernel = _make_combined_loss_kernel(batch=B, tile_rows=tb, tiles_per_core=half)

    partials = pl.pallas_call(
        kernel,
        out_shape=jax.ShapeDtypeStruct((2, 1, 1), jnp.float32),
        grid=grid,
        in_specs=[
            pl.BlockSpec((tb, C), _in_map),
            pl.BlockSpec((tb, C), _in_map),
            pl.BlockSpec((tb, 1), _in_map),
        ],
        out_specs=pl.BlockSpec((1, 1, 1), lambda c, i: (c, 0, 0)),
        scratch_shapes=[pltpu.VMEM((tb, 1), jnp.float32)],
        compiler_params=pltpu.CompilerParams(
            dimension_semantics=("parallel", "arbitrary"),
            vmem_limit_bytes=vmem_limit),
    )(factual_fused, counterfactual_fused, labels2d)

    return jnp.sum(partials)


def _reference_loss(f, c, labels):
    # Pure-JAX reference reproducing the PyTorch semantics, for a sanity check.
    f = f.astype(jnp.float32)
    c = c.astype(jnp.float32)
    onehot = jax.nn.one_hot(labels, f.shape[1], dtype=jnp.float32)
    ce_f = jnp.mean(jax.nn.logsumexp(f, axis=-1) - jnp.sum(f * onehot, axis=-1))
    ce_c = jnp.mean(jax.nn.logsumexp(c, axis=-1) - jnp.sum(c * onehot, axis=-1))
    kl = jnp.sum(jnp.where(f > 0, f * (jnp.log(f) - jnp.log(c)), 0.0)) / f.shape[0]
    return ce_f + ce_c + kl


if __name__ == "__main__":
    B, C = 8, 16  # small shapes: batch=8, num_classes=16

    key = jax.random.PRNGKey(0)
    k1, k2, k3, k4 = jax.random.split(key, 4)

    # factual/counterfactual are fused class distributions (strictly positive,
    # as required by torch.log / kl_div in the reference forward).
    factual_fused = jax.nn.softmax(jax.random.normal(k1, (B, C), jnp.float32), axis=-1)
    counterfactual_fused = jax.nn.softmax(jax.random.normal(k2, (B, C), jnp.float32), axis=-1)
    predictions = jax.random.normal(k3, (B, C), jnp.float32)  # unused by the loss
    labels = jax.random.randint(k4, (B,), 0, C, dtype=jnp.int32)

    total = combined_loss(factual_fused, counterfactual_fused, predictions, labels)
    total = jax.block_until_ready(total)

    ref = _reference_loss(factual_fused, counterfactual_fused, labels)
    assert jnp.allclose(total, ref, rtol=1e-5, atol=1e-5), (total, ref)

    print("KERNEL_OK")
</pallas_src>

<mosaic_0001>
module attributes {stable_mosaic.version = 11 : i64} {
  func.func @kernel(%arg0: i32, %arg1: i32, %arg2: memref<8x16xf32, #tpu.memory_space<vmem>>, %arg3: memref<8x16xf32, #tpu.memory_space<vmem>>, %arg4: memref<8x1xi32, #tpu.memory_space<vmem>>, %arg5: memref<1x1x1xf32, #tpu.memory_space<vmem>>, %arg6: memref<8x1xf32, #tpu.memory_space<vmem>>) attributes {dimension_semantics = [#tpu.dimension_semantics<parallel>, #tpu.dimension_semantics<arbitrary>], iteration_bounds = array<i64: 2, 1>, scalar_prefetch = 0 : i64, scratch_operands = 1 : i64, tpu.core_type = #tpu.core_type<tc>, window_params = [{transform_indices = @transform_0, window_bounds = array<i64: 8, 16>}, {transform_indices = @transform_1, window_bounds = array<i64: 8, 16>}, {transform_indices = @transform_2, window_bounds = array<i64: 8, 1>}, {transform_indices = @transform_3, window_bounds = array<i64: 1, 1, 1>}]} {
    %c0_i32 = arith.constant 0 : i32
    %0 = arith.cmpi eq, %arg1, %c0_i32 : i32
    %1 = arith.extui %0 : i1 to i32
    %c0_i32_0 = arith.constant 0 : i32
    %2 = arith.cmpi ne, %1, %c0_i32_0 : i32
    scf.if %2 {
      %cst_22 = arith.constant 0.000000e+00 : f32
      %61 = vector.broadcast %cst_22 : f32 to vector<8x1xf32>
      %c0_23 = arith.constant 0 : index
      %c0_24 = arith.constant 0 : index
      %62 = vector.load %arg6[%c0_23, %c0_24] : memref<8x1xf32, #tpu.memory_space<vmem>>, vector<8x1xf32>
      tpu.vector_store %arg6[%c0_23, %c0_24], %61 {strides = array<i32>} : memref<8x1xf32, #tpu.memory_space<vmem>>, vector<8x1xf32>,
    } else {
    }
    %c0 = arith.constant 0 : index
    %c0_1 = arith.constant 0 : index
    %3 = vector.load %arg2[%c0, %c0_1] : memref<8x16xf32, #tpu.memory_space<vmem>>, vector<8x16xf32>
    %c0_2 = arith.constant 0 : index
    %c0_3 = arith.constant 0 : index
    %4 = vector.load %arg3[%c0_2, %c0_3] : memref<8x16xf32, #tpu.memory_space<vmem>>, vector<8x16xf32>
    %c0_4 = arith.constant 0 : index
    %c0_5 = arith.constant 0 : index
    %5 = vector.load %arg4[%c0_4, %c0_5] : memref<8x1xi32, #tpu.memory_space<vmem>>, vector<8x1xi32>
    %6 = tpu.iota {dimensions = array<i32: 1>} : vector<8x16xi32>
    %7 = vector.broadcast %5 : vector<8x1xi32> to vector<8x16xi32>
    %8 = arith.cmpi eq, %6, %7 : vector<8x16xi32>
    %cst = arith.constant dense<0xFF800000> : vector<8xf32>
    %9 = vector.multi_reduction <maximumf>, %3, %cst [1] : vector<8x16xf32> to vector<8xf32>
    %10 = vector.shape_cast %9 : vector<8xf32> to vector<8x1xf32>
    %11 = vector.broadcast %10 : vector<8x1xf32> to vector<8x16xf32>
    %12 = arith.subf %3, %11 : vector<8x16xf32>
    %13 = math.exp %12 : vector<8x16xf32>
    %cst_6 = arith.constant dense<0.000000e+00> : vector<8xf32>
    %14 = vector.multi_reduction <add>, %13, %cst_6 [1] : vector<8x16xf32> to vector<8xf32>
    %15 = vector.shape_cast %14 : vector<8xf32> to vector<8x1xf32>
    %16 = math.log %15 : vector<8x1xf32>
    %17 = arith.addf %10, %16 : vector<8x1xf32>
    %cst_7 = arith.constant dense<0xFF800000> : vector<8xf32>
    %18 = vector.multi_reduction <maximumf>, %4, %cst_7 [1] : vector<8x16xf32> to vector<8xf32>
    %19 = vector.shape_cast %18 : vector<8xf32> to vector<8x1xf32>
    %20 = vector.broadcast %19 : vector<8x1xf32> to vector<8x16xf32>
    %21 = arith.subf %4, %20 : vector<8x16xf32>
    %22 = math.exp %21 : vector<8x16xf32>
    %cst_8 = arith.constant dense<0.000000e+00> : vector<8xf32>
    %23 = vector.multi_reduction <add>, %22, %cst_8 [1] : vector<8x16xf32> to vector<8xf32>
    %24 = vector.shape_cast %23 : vector<8xf32> to vector<8x1xf32>
    %25 = math.log %24 : vector<8x1xf32>
    %26 = arith.addf %19, %25 : vector<8x1xf32>
    %27 = arith.addf %3, %4 : vector<8x16xf32>
    %cst_9 = arith.constant 0.000000e+00 : f32
    %28 = vector.broadcast %cst_9 : f32 to vector<8x16xf32>
    %29 = arith.select %8, %27, %28 : vector<8x16xi1>, vector<8x16xf32>
    %cst_10 = arith.constant dense<0.000000e+00> : vector<8xf32>
    %30 = vector.multi_reduction <add>, %29, %cst_10 [1] : vector<8x16xf32> to vector<8xf32>
    %31 = vector.shape_cast %30 : vector<8xf32> to vector<8x1xf32>
    %32 = math.log %3 : vector<8x16xf32>
    %33 = math.log %4 : vector<8x16xf32>
    %cst_11 = arith.constant 0.000000e+00 : f32
    %34 = vector.broadcast %cst_11 : f32 to vector<8x16xf32>
    %35 = arith.cmpf ogt, %3, %34 : vector<8x16xf32>
    %36 = arith.subf %32, %33 : vector<8x16xf32>
    %37 = arith.mulf %3, %36 : vector<8x16xf32>
    %cst_12 = arith.constant 0.000000e+00 : f32
    %38 = vector.broadcast %cst_12 : f32 to vector<8x16xf32>
    %39 = arith.select %35, %37, %38 : vector<8x16xi1>, vector<8x16xf32>
    %cst_13 = arith.constant dense<0.000000e+00> : vector<8xf32>
    %40 = vector.multi_reduction <add>, %39, %cst_13 [1] : vector<8x16xf32> to vector<8xf32>
    %41 = vector.shape_cast %40 : vector<8xf32> to vector<8x1xf32>
    %c1_i32 = arith.constant 1 : i32
    %42 = arith.muli %arg0, %c1_i32 : i32
    %43 = arith.addi %42, %arg1 : i32
    %c8_i32 = arith.constant 8 : i32
    %44 = arith.muli %43, %c8_i32 : i32
    %45 = tpu.iota {dimensions = array<i32: 0>} : vector<8x1xi32>
    %46 = vector.broadcast %44 : i32 to vector<8x1xi32>
    %47 = arith.addi %46, %45 : vector<8x1xi32>
    %48 = arith.addf %17, %26 : vector<8x1xf32>
    %49 = arith.subf %48, %31 : vector<8x1xf32>
    %50 = arith.addf %49, %41 : vector<8x1xf32>
    %c0_14 = arith.constant 0 : index
    %c0_15 = arith.constant 0 : index
    %51 = vector.load %arg6[%c0_14, %c0_15] : memref<8x1xf32, #tpu.memory_space<vmem>>, vector<8x1xf32>
    %c8_i32_16 = arith.constant 8 : i32
    %52 = vector.broadcast %c8_i32_16 : i32 to vector<8x1xi32>
    %53 = arith.cmpi slt, %47, %52 : vector<8x1xi32>
    %cst_17 = arith.constant 0.000000e+00 : f32
    %54 = vector.broadcast %cst_17 : f32 to vector<8x1xf32>
    %55 = arith.select %53, %50, %54 : vector<8x1xi1>, vector<8x1xf32>
    %56 = arith.addf %51, %55 : vector<8x1xf32>
    %c0_18 = arith.constant 0 : index
    %c0_19 = arith.constant 0 : index
    %57 = vector.load %arg6[%c0_18, %c0_19] : memref<8x1xf32, #tpu.memory_space<vmem>>, vector<8x1xf32>
    tpu.vector_store %arg6[%c0_18, %c0_19], %56 {strides = array<i32>} : memref<8x1xf32, #tpu.memory_space<vmem>>, vector<8x1xf32>,
    %c0_i32_20 = arith.constant 0 : i32
    %58 = arith.cmpi eq, %arg1, %c0_i32_20 : i32
    %59 = arith.extui %58 : i1 to i32
    %c0_i32_21 = arith.constant 0 : i32
    %60 = arith.cmpi ne, %59, %c0_i32_21 : i32
    scf.if %60 {
      %c0_22 = arith.constant 0 : index
      %c0_23 = arith.constant 0 : index
      %61 = vector.load %arg6[%c0_22, %c0_23] : memref<8x1xf32, #tpu.memory_space<vmem>>, vector<8x1xf32>
      %62 = vector.shape_cast %61 : vector<8x1xf32> to vector<1x8x1xf32>
      %cst_24 = arith.constant dense<0.000000e+00> : vector<1xf32>
      %63 = vector.multi_reduction <add>, %62, %cst_24 [1, 2] : vector<1x8x1xf32> to vector<1xf32>
      %64 = vector.shape_cast %63 : vector<1xf32> to vector<1x1x1xf32>
      %65 = vector.extract %64[0, 0, 0] : f32 from vector<1x1x1xf32>
      %cst_25 = arith.constant 1.250000e-01 : f32
      %66 = arith.mulf %65, %cst_25 : f32
      %67 = vector.broadcast %66 : f32 to vector<1x1x1xf32>
      %c0_26 = arith.constant 0 : index
      %c0_27 = arith.constant 0 : index
      %c0_28 = arith.constant 0 : index
      %68 = vector.load %arg5[%c0_26, %c0_27, %c0_28] : memref<1x1x1xf32, #tpu.memory_space<vmem>>, vector<1x1x1xf32>
      tpu.vector_store %arg5[%c0_26, %c0_27, %c0_28], %67 {strides = array<i32>} : memref<1x1x1xf32, #tpu.memory_space<vmem>>, vector<1x1x1xf32>,
    } else {
    }
    return
  }
  func.func @transform_0(%arg0: i32, %arg1: i32) -> (i32, i32) {
    %c1_i32 = arith.constant 1 : i32
    %0 = arith.muli %arg0, %c1_i32 : i32
    %1 = arith.addi %0, %arg1 : i32
    %c0_i32 = arith.constant 0 : i32
    %2 = arith.minsi %1, %c0_i32 : i32
    %c0_i32_0 = arith.constant 0 : i32
    %c0_i32_1 = arith.constant 0 : i32
    return %2, %c0_i32_0 : i32, i32
  }
  func.func @transform_1(%arg0: i32, %arg1: i32) -> (i32, i32) {
    %c1_i32 = arith.constant 1 : i32
    %0 = arith.muli %arg0, %c1_i32 : i32
    %1 = arith.addi %0, %arg1 : i32
    %c0_i32 = arith.constant 0 : i32
    %2 = arith.minsi %1, %c0_i32 : i32
    %c0_i32_0 = arith.constant 0 : i32
    %c0_i32_1 = arith.constant 0 : i32
    return %2, %c0_i32_0 : i32, i32
  }
  func.func @transform_2(%arg0: i32, %arg1: i32) -> (i32, i32) {
    %c1_i32 = arith.constant 1 : i32
    %0 = arith.muli %arg0, %c1_i32 : i32
    %1 = arith.addi %0, %arg1 : i32
    %c0_i32 = arith.constant 0 : i32
    %2 = arith.minsi %1, %c0_i32 : i32
    %c0_i32_0 = arith.constant 0 : i32
    %c0_i32_1 = arith.constant 0 : i32
    return %2, %c0_i32_0 : i32, i32
  }
  func.func @transform_3(%arg0: i32, %arg1: i32) -> (i32, i32, i32) {
    %c0_i32 = arith.constant 0 : i32
    %c0_i32_0 = arith.constant 0 : i32
    %c0_i32_1 = arith.constant 0 : i32
    return %arg0, %c0_i32, %c0_i32_0 : i32, i32, i32
  }
}

</mosaic_0001>

<llo_original>
// kernel: tpu_custom_call.1
$region0: #{tpu_custom_call.1}
  #allocation0 [shape = 'u32[]', space=smem, size = 0x4, offset = 0x4, fixed_abs, tag = 'smem constant byte address 0x4 - core index']
  #allocation1 [shape = 'u32[144,128]{1,0:T(1,128)}', space=vmem, size = 0x12000, scoped, tag = 'internal scratch']
  #allocation2 [shape = 'f32[8,1]{1,0:T(8,128)}', space=vmem, size = 0x1000, scoped, tag = 'scratch operand']
  %s0 = inlined_call_operand.vmem [shape: f32[8,16], index: 0, kind: input, shape index: {}]
  %s1 = inlined_call_operand.hbm [shape: f32[8,16], index: 1, kind: input, shape index: {}]
  %s2 = inlined_call_operand.vmem [shape: s32[8,1], index: 2, kind: input, shape index: {}]
  %s3 = inlined_call_operand.vmem [shape: f32[2,1,1], index: 3, kind: output, shape index: {}]
  %s4 = sld [smem:[#allocation0]]
  $region57: #{tpu_custom_call.1} parent=0
    _
  %s6 = ssub.s32 1, %s4
  %s7 = scalar_select 0, %s6, %s4
  $region1: #{tpu_custom_call.1} parent=0
    #allocation3 [shape = 'u8[8192]{0}', space=vmem, size = 0x2000, scoped, tag = 'input window, operand 1']
    #allocation4 [shape = 's32[2]{0}', space=sflag, size = 0x8, scoped, tag = 'scoped memory for tpu_custom_call.1']
    %8 = vsyncpa [#allocation4], 0
    %s9 = scalar_lea.sflag [#allocation4], 1
    %10 = vsyncpa %s9, 0
    loop: start=0, step=1, limit=4
    $region2: #{tpu_custom_call.1} parent=1 // loop_pre_header
      _
    $region3: #{tpu_custom_call.1} parent=1 // loop_header
      %s12 = sphi 0, %s16
      %p13 = scmp.ge.s32.totalorder %s12, 4
      %s19 = sphi 0, %s31
      %s20 = sphi 0, %s27
      %s21 = sphi 0, %s19
      %s22 = sphi 0, %s20
      %s23 = sphi 0, %s21
      %s24 = sphi 0, %s22
      %s40 = sphi 0, %s42
      %s43 = sphi 0, %s40
      %s44 = sphi 0, %s43
      %s60 = sphi 0, %s44
      %s72 = sphi 0, %s74
      %s75 = sphi 0, %s72
      %s76 = sphi 0, %s75
      %s92 = sphi 0, %s76
      %s104 = sphi 0, %s106
      %s107 = sphi 0, %s104
      %s108 = sphi 0, %s107
      %s124 = sphi 0, %s108
      %s130 = sphi 0, %s132
      %s133 = sphi 0, %s130
      %s134 = sphi 0, %s133
      %s150 = sphi 0, %s134
    $region4: #{tpu_custom_call.1} parent=1 // loop_header_branch
      %15 = sbr.rel (%p13) target = $region8
    $region5: #{tpu_custom_call.1} parent=1 // loop_body
      %s17 = ssub.s32 %s12, 1
      %s18 = ssub.s32 %s12, 2
      %s25 = sadd.s32 1, %s20
      %p26 = scmp.ge.s32.totalorder %s25, 1
      %s27 = scalar_select %p26, 0, %s25
      %s28 = sadd.s32 1, %s19
      %s29 = scalar_select %p26, %s28, %s19
      %p30 = scmp.ge.s32.totalorder %s29, 2
      %s31 = scalar_select %p30, 0, %s29
      %s32 = sadd.s32 %s19, %s20
      %p33 = scmp.lt.s32.totalorder %s32, 0
      %s34 = scalar_select %p33, %s32, 0
      %s35 = sadd.s32 %s31, %s27
      %p36 = scmp.lt.s32.totalorder %s35, 0
      %s37 = scalar_select %p36, %s35, 0
      %s38 = ssub.s32 %s34, %s37
      %p39 = scmp.eq.s32.totalorder %s38, 0
      %s41 = sadd.s32 %s40, 1
      %s42 = scalar_select %p39, %s40, %s41
      %p45 = pneg %p39
      %p46 = scmp.eq.s32.totalorder %s12, 1
      %p47 = por %p45, %p46
      %p48 = scmp.ne.s32.totalorder %s40, %s43
      %p49 = scmp.eq.s32.totalorder %s12, 0
      %p50 = por %p48, %p49
      %p51 = scmp.ne.s32.totalorder %s40, %s43
      %p52 = scmp.eq.s32.totalorder %s17, 1
      %p53 = por %p51, %p52
      %p54 = scmp.ne.s32.totalorder %s43, %s44
      %p55 = scmp.eq.s32.totalorder %s17, 0
      %p56 = por %p54, %p55
      %p57 = scmp.ne.s32.totalorder %s43, %s44
      %p58 = scmp.eq.s32.totalorder %s18, 1
      %p59 = por %p57, %p58
      %p61 = scmp.ne.s32.totalorder %s44, %s60
      %p62 = scmp.eq.s32.totalorder %s18, 0
      %p63 = por %p61, %p62
      %s64 = sadd.s32 %s19, %s20
      %p65 = scmp.lt.s32.totalorder %s64, 0
      %s66 = scalar_select %p65, %s64, 0
      %s67 = sadd.s32 %s31, %s27
      %p68 = scmp.lt.s32.totalorder %s67, 0
      %s69 = scalar_select %p68, %s67, 0
      %s70 = ssub.s32 %s66, %s69
      %p71 = scmp.eq.s32.totalorder %s70, 0
      %s73 = sadd.s32 %s72, 1
      %s74 = scalar_select %p71, %s72, %s73
      %p77 = pneg %p71
      %p78 = scmp.eq.s32.totalorder %s12, 1
      %p79 = por %p77, %p78
      %p80 = scmp.ne.s32.totalorder %s72, %s75
      %p81 = scmp.eq.s32.totalorder %s12, 0
      %p82 = por %p80, %p81
      %p83 = scmp.ne.s32.totalorder %s72, %s75
      %p84 = scmp.eq.s32.totalorder %s17, 1
      %p85 = por %p83, %p84
      %p86 = scmp.ne.s32.totalorder %s75, %s76
      %p87 = scmp.eq.s32.totalorder %s17, 0
      %p88 = por %p86, %p87
      %p89 = scmp.ne.s32.totalorder %s75, %s76
      %p90 = scmp.eq.s32.totalorder %s18, 1
      %p91 = por %p89, %p90
      %p93 = scmp.ne.s32.totalorder %s76, %s92
      %p94 = scmp.eq.s32.totalorder %s18, 0
      %p95 = por %p93, %p94
      %s96 = sadd.s32 %s19, %s20
      %p97 = scmp.lt.s32.totalorder %s96, 0
      %s98 = scalar_select %p97, %s96, 0
      %s99 = sadd.s32 %s31, %s27
      %p100 = scmp.lt.s32.totalorder %s99, 0
      %s101 = scalar_select %p100, %s99, 0
      %s102 = ssub.s32 %s98, %s101
      %p103 = scmp.eq.s32.totalorder %s102, 0
      %s105 = sadd.s32 %s104, 1
      %s106 = scalar_select %p103, %s104, %s105
      %p109 = pneg %p103
      %p110 = scmp.eq.s32.totalorder %s12, 1
      %p111 = por %p109, %p110
      %p112 = scmp.ne.s32.totalorder %s104, %s107
      %p113 = scmp.eq.s32.totalorder %s12, 0
      %p114 = por %p112, %p113
      %p115 = scmp.ne.s32.totalorder %s104, %s107
      %p116 = scmp.eq.s32.totalorder %s17, 1
      %p117 = por %p115, %p116
      %p118 = scmp.ne.s32.totalorder %s107, %s108
      %p119 = scmp.eq.s32.totalorder %s17, 0
      %p120 = por %p118, %p119
      %p121 = scmp.ne.s32.totalorder %s107, %s108
      %p122 = scmp.eq.s32.totalorder %s18, 1
      %p123 = por %p121, %p122
      %p125 = scmp.ne.s32.totalorder %s108, %s124
      %p126 = scmp.eq.s32.totalorder %s18, 0
      %p127 = por %p125, %p126
      %s128 = ssub.s32 %s19, %s31
      %p129 = scmp.eq.s32.totalorder %s128, 0
      %s131 = sadd.s32 %s130, 1
      %s132 = scalar_select %p129, %s130, %s131
      %p135 = pneg %p129
      %p136 = scmp.eq.s32.totalorder %s12, 1
      %p137 = por %p135, %p136
      %p138 = scmp.ne.s32.totalorder %s130, %s133
      %p139 = scmp.eq.s32.totalorder %s12, 0
      %p140 = por %p138, %p139
      %p141 = scmp.ne.s32.totalorder %s130, %s133
      %p142 = scmp.eq.s32.totalorder %s17, 1
      %p143 = por %p141, %p142
      %p144 = scmp.ne.s32.totalorder %s133, %s134
      %p145 = scmp.eq.s32.totalorder %s17, 0
      %p146 = por %p144, %p145
      %p147 = scmp.ne.s32.totalorder %s133, %s134
      %p148 = scmp.eq.s32.totalorder %s18, 1
      %p149 = por %p147, %p148
      %p151 = scmp.ne.s32.totalorder %s134, %s150
      %p152 = scmp.eq.s32.totalorder %s18, 0
      %p153 = por %p151, %p152
      %p154 = scmp.le.s32.totalorder 1, %s12
      %p155 = scmp.lt.s32.totalorder %s12, 3
      %p156 = pnand %p154, %p155
      %p157 = pneg %p156
      // Predicated region
      $region9: #{tpu_custom_call.1} parent=5 // pred_check
        _
      $region10: #{tpu_custom_call.1} parent=5 // pred_check_branch
        %159 = sbr.rel (%p156) target = $region12
      $region11: #{tpu_custom_call.1} parent=5 // pred_region
        %s160 = ssub.s32 %s12, 1
      $region12: #{tpu_custom_call.1} parent=5 // pred_fallthru
        _
      %p161 = scmp.lt.s32.totalorder %s12, 2
      // Predicated region
      $region13: #{tpu_custom_call.1} parent=5 // pred_check
        %p162 = pneg %p161
      $region14: #{tpu_custom_call.1} parent=5 // pred_check_branch
        %164 = sbr.rel (%p162) target = $region16
      $region15: #{tpu_custom_call.1} parent=5 // pred_region
        // Predicated region
        $region17: #{tpu_custom_call.1} parent=15 // pred_check
          %p165 = pneg %p50
        $region18: #{tpu_custom_call.1} parent=15 // pred_check_branch
          %167 = sbr.rel (%p165) target = $region20
        $region19: #{tpu_custom_call.1} parent=15 // pred_region
          %s168 = sadd.s32 %s19, %s20
          %p169 = scmp.lt.s32.totalorder %s168, 0
          %s170 = scalar_select %p169, %s168, 0
          %p171 = scmp.lt.s32.totalorder %s170, 0
          %s172 = scalar_select %p171, %s170, 0
          %s173 = smul.addr %s172, 8
          %s174 = scalar_lea.vmem %s0, %s173
          %s175 = sadd.s32 %s19, %s20
          %p176 = scmp.lt.s32.totalorder %s175, 0
          %s177 = scalar_select %p176, %s175, 0
        $region20: #{tpu_custom_call.1} parent=15 // pred_fallthru
          _
        // Predicated region
        $region21: #{tpu_custom_call.1} parent=15 // pred_check
          %p178 = pneg %p82
        $region22: #{tpu_custom_call.1} parent=15 // pred_check_branch
          %180 = sbr.rel (%p178) target = $region24
        $region23: #{tpu_custom_call.1} parent=15 // pred_region
          %s181 = sand.u32 %s72, 1
          %s182 = scalar_lea.sflag [#allocation4], %s181
          %s183 = sand.u32 %s72, 1
          %s184 = smul.addr %s183, 8
          %s185 = scalar_lea.vmem [#allocation3], %s184
          %s186 = sadd.s32 %s19, %s20
          %p187 = scmp.lt.s32.totalorder %s186, 0
          %s188 = scalar_select %p187, %s186, 0
          %s190 = ssub.s32 128, 128
          %191 = vsyncadd %s182, %s190
          %s192 = smul.addr %s188, 128
          %s193 = scalar_lea.hbm %s1, %s192
          %s195 = sshll.u32 %s185, 4
          %s196 = int_to_ptr.vmem [resolvable:$true] %s195
          %198 = dma.hbm_to_vmem [thread:$0]  %s193, 128, %s196, %s182
        $region24: #{tpu_custom_call.1} parent=15 // pred_fallthru
          _
        // Predicated region
        $region25: #{tpu_custom_call.1} parent=15 // pred_check
          %p199 = pneg %p114
        $region26: #{tpu_custom_call.1} parent=15 // pred_check_branch
          %201 = sbr.rel (%p199) target = $region28
        $region27: #{tpu_custom_call.1} parent=15 // pred_region
          %s202 = sadd.s32 %s19, %s20
          %p203 = scmp.lt.s32.totalorder %s202, 0
          %s204 = scalar_select %p203, %s202, 0
          %p205 = scmp.lt.s32.totalorder %s204, 0
          %s206 = scalar_select %p205, %s204, 0
          %s207 = smul.addr %s206, 8
          %s208 = scalar_lea.vmem %s2, %s207
          %s209 = sadd.s32 %s19, %s20
          %p210 = scmp.lt.s32.totalorder %s209, 0
          %s211 = scalar_select %p210, %s209, 0
        $region28: #{tpu_custom_call.1} parent=15 // pred_fallthru
          _
      $region16: #{tpu_custom_call.1} parent=5 // pred_fallthru
        _
      %p212 = scmp.le.s32.totalorder 1, %s12
      %p213 = scmp.lt.s32.totalorder %s12, 3
      %p214 = pnand %p212, %p213
      %p215 = pneg %p214
      // Predicated region
      $region29: #{tpu_custom_call.1} parent=5 // pred_check
        _
      $region30: #{tpu_custom_call.1} parent=5 // pred_check_branch
        %217 = sbr.rel (%p214) target = $region32
      $region31: #{tpu_custom_call.1} parent=5 // pred_region
        %s218 = ssub.s32 %s12, 1
        %s219 = sand.u32 %s75, 1
        %s220 = scalar_lea.sflag [#allocation4], %s219
        %s221 = sand.u32 %s75, 1
        %s222 = smul.addr %s221, 8
        %s223 = scalar_lea.vmem [#allocation3], %s222
        // Predicated region
        $region33: #{tpu_custom_call.1} parent=31 // pred_check
          %p224 = pneg %p88
        $region34: #{tpu_custom_call.1} parent=31 // pred_check_branch
          %226 = sbr.rel (%p224) target = $region36
        $region35: #{tpu_custom_call.1} parent=31 // pred_region
          %227 = dma.done %s220, 128
        $region36: #{tpu_custom_call.1} parent=31 // pred_fallthru
          _
        %s228 = sadd.s32 %s21, %s22
        %p229 = scmp.lt.s32.totalorder %s228, 0
        %s230 = scalar_select %p229, %s228, 0
        %p231 = scmp.lt.s32.totalorder %s230, 0
        %s232 = scalar_select %p231, %s230, 0
        %s233 = smul.addr %s232, 8
        %s234 = scalar_lea.vmem %s0, %s233
        %p235 = pneg %p56
        %p236 = pneg %p53
        %s237 = sand.u32 %s75, 1
        %s238 = scalar_lea.sflag [#allocation4], %s237
        %s239 = sand.u32 %s75, 1
        %s240 = smul.addr %s239, 8
        %s241 = scalar_lea.vmem [#allocation3], %s240
        %p242 = pneg %p88
        %p243 = pneg %p85
        %s244 = sadd.s32 %s21, %s22
        %p245 = scmp.lt.s32.totalorder %s244, 0
        %s246 = scalar_select %p245, %s244, 0
        %p247 = scmp.lt.s32.totalorder %s246, 0
        %s248 = scalar_select %p247, %s246, 0
        %s249 = smul.addr %s248, 8
        %s250 = scalar_lea.vmem %s2, %s249
        %p251 = pneg %p120
        %p252 = pneg %p117
        %p253 = pneg %p146
        %p254 = pneg %p143
        %p255 = scmp.lt.s32.totalorder %s21, 1
        %s256 = scalar_select %p255, %s21, 1
        %s257 = scalar_lea.vmem %s3, %s256
        %s258 = sadd.s32 %s21, %s22
        %p259 = scmp.lt.s32.totalorder %s258, 0
        %s260 = scalar_select %p259, %s258, 0
        %p261 = scmp.lt.s32.totalorder %s260, 0
        %s262 = scalar_select %p261, %s260, 0
        %s263 = smul.addr %s262, 8
        %s264 = scalar_lea.vmem %s0, %s263
        %s265 = sadd.s32 %s21, %s22
        %p266 = scmp.lt.s32.totalorder %s265, 0
        %s267 = scalar_select %p266, %s265, 0
        %s268 = sadd.s32 %s21, %s22
        %p269 = scmp.lt.s32.totalorder %s268, 0
        %s270 = scalar_select %p269, %s268, 0
        %s271 = sadd.s32 %s21, %s22
        %p272 = scmp.lt.s32.totalorder %s271, 0
        %s273 = scalar_select %p272, %s271, 0
        %p274 = scmp.lt.s32.totalorder %s273, 0
        %s275 = scalar_select %p274, %s273, 0
        %s276 = smul.addr %s275, 8
        %s277 = scalar_lea.vmem %s2, %s276
        %s278 = sadd.s32 %s21, %s22
        %p279 = scmp.lt.s32.totalorder %s278, 0
        %s280 = scalar_select %p279, %s278, 0
        %p281 = scmp.lt.s32.totalorder %s21, 1
        %s282 = scalar_select %p281, %s21, 1
        %s283 = scalar_lea.vmem %s3, %s282
        %p284 = scmp.eq.s32.totalorder %s22, 0
        // Predicated region
        $region37: #{tpu_custom_call.1} parent=31 // pred_check
          %p285 = pneg %p284
        $region38: #{tpu_custom_call.1} parent=31 // pred_check_branch
          %287 = sbr.rel (%p285) target = $region40
        $region39: #{tpu_custom_call.1} parent=31 // pred_region
          %vm288 = vcmask 7168
          %289 = vst.msk [vmem:[#allocation2] sm:$0xff] %vm288, 0.0
        $region40: #{tpu_custom_call.1} parent=31 // pred_fallthru
          _
        %v290 = vld [vmem:[%s264] sm:$0xff]
        %v291 = vld [vmem:[%s223] sm:$0xff]
        %v292 = vld [vmem:[%s277] sm:$0xff]
        %v293 = vlaneseq
        %v294 = vand.u32 %v293, 127
        %295 = vset.pattern.permute.xlu0 0
        %296 = vperm.xlu0 %295, %v292
        %v297 = vpop.permute.xlu0 %296
        %vm298 = vcmp.eq.s32.totalorder %v294, %v297
        %vm299 = vcmask 130048
        %v300 = vsel %vm299, %v290, -inf
        %301 = vmax.xlane.f32.xlu0 %v300
        %v302 = vpop.xlane.xlu0 %301
        %v303 = vsub.f32 %v290, %v302
        %v304 = vmul.f32 %v303, 1.442695
        %v305 = vpow.pop %v304
        %v306 = vsel %vm299, %v305, 0.0
        %307 = vadd.xlane.f32.xlu0 %v306
        %v308 = vpop.xlane.xlu0 %307
        %v309 = vlog2.pop %v308
        %v310 = vmul.f32 %v309, 0.6931472
        %v311 = vadd.f32 %v302, %v310
        %v312 = vsel %vm299, %v291, -inf
        %313 = vmax.xlane.f32.xlu0 %v312
        %v314 = vpop.xlane.xlu0 %313
        %v315 = vsub.f32 %v291, %v314
        %v316 = vmul.f32 %v315, 1.442695
        %v317 = vpow.pop %v316
        %v318 = vsel %vm299, %v317, 0.0
        %319 = vadd.xlane.f32.xlu0 %v318
        %v320 = vpop.xlane.xlu0 %319
        %v321 = vlog2.pop %v320
        %v322 = vmul.f32 %v321, 0.6931472
        %v323 = vadd.f32 %v314, %v322
        %v324 = vadd.f32 %v290, %v291
        %v325 = vsel %vm298, %v324, 0.0
        %v326 = vsel %vm299, %v325, 0.0
        %327 = vadd.xlane.f32.xlu0 %v326
        %v328 = vpop.xlane.xlu0 %327
        %v329 = vlog2.pop %v290
        %v330 = vmul.f32 %v329, 0.6931472
        %v331 = vlog2.pop %v291
        %v332 = vmul.f32 %v331, 0.6931472
        %vm333 = vcmp.gt.f32.partialorder %v290, 0.0
        %v334 = vsub.f32 %v330, %v332
        %v335 = vmul.f32 %v290, %v334
        %v336 = vsel %vm333, %v335, 0.0
        %v337 = vsel %vm299, %v336, 0.0
        %338 = vadd.xlane.f32.xlu0 %v337
        %v339 = vpop.xlane.xlu0 %338
        %s340 = sadd.s32 %s21, %s22
        %s341 = smul.u32 %s340, 8
        %v342 = vlaneseq
        %v343 = vshrl.u32 %v342, 7
        %v344 = vstv %s341
        %v345 = vadd.s32 %v344, %v343
        %v346 = vadd.f32 %v311, %v323
        %v347 = vsub.f32 %v346, %v328
        %v348 = vadd.f32 %v347, %v339
        %v349 = vld [vmem:[#allocation2] sm:$0xff]
        %vm350 = vcmp.lt.s32.totalorder %v345, 8
        %v351 = vsel %vm350, %v348, 0.0
        %v352 = vadd.f32 %v349, %v351
        %vm353 = vcmask 7168
        %354 = vst.msk [vmem:[#allocation2] sm:$0xff] %vm353, %v352
        // Predicated region
        $region41: #{tpu_custom_call.1} parent=31 // pred_check
          %p355 = pneg %p284
        $region42: #{tpu_custom_call.1} parent=31 // pred_check_branch
          %357 = sbr.rel (%p355) target = $region44
        $region43: #{tpu_custom_call.1} parent=31 // pred_region
          %v358 = vld [vmem:[#allocation2] sm:$0xff]
          %v359 = vsel %vm353, %v358, 0.0
          %360 = vadd.xlane.f32.xlu0 %v359
          %v361 = vpop.xlane.xlu0 %360
          %v362 = vrot.slane %v361, 4
          %v363 = vadd.f32 %v361, %v362
          %v364 = vrot.slane %v363, 2
          %v365 = vadd.f32 %v363, %v364
          %v366 = vrot.slane %v365, 1
          %v367 = vadd.f32 %v365, %v366
          %s368 = vtos %v367
          %s369 = smul.f32 %s368, 0.125
          %v370 = vstv %s369
          %vm371 = vcmask 0
          %372 = vst.msk [vmem:[%s283] sm:$0x1] %vm371, %v370
        $region44: #{tpu_custom_call.1} parent=31 // pred_fallthru
          _
        %p373 = scmp.lt.s32.totalorder %s21, 1
        %s374 = scalar_select %p373, %s21, 1
        %s375 = scalar_lea.vmem %s3, %s374
        // Predicated region
        $region45: #{tpu_custom_call.1} parent=31 // pred_check
          %p376 = pneg %p143
        $region46: #{tpu_custom_call.1} parent=31 // pred_check_branch
          %378 = sbr.rel (%p376) target = $region48
        $region47: #{tpu_custom_call.1} parent=31 // pred_region
          _
        $region48: #{tpu_custom_call.1} parent=31 // pred_fallthru
          _
      $region32: #{tpu_custom_call.1} parent=5 // pred_fallthru
        _
      %p379 = scmp.le.s32.totalorder 2, %s12
      // Predicated region
      $region49: #{tpu_custom_call.1} parent=5 // pred_check
        %p380 = pneg %p379
      $region50: #{tpu_custom_call.1} parent=5 // pred_check_branch
        %382 = sbr.rel (%p380) target = $region52
      $region51: #{tpu_custom_call.1} parent=5 // pred_region
        %s383 = ssub.s32 %s12, 2
        // Predicated region
        $region53: #{tpu_custom_call.1} parent=51 // pred_check
          %p384 = pneg %p149
        $region54: #{tpu_custom_call.1} parent=51 // pred_check_branch
          %386 = sbr.rel (%p384) target = $region56
        $region55: #{tpu_custom_call.1} parent=51 // pred_region
          %p387 = scmp.lt.s32.totalorder %s23, 1
          %s388 = scalar_select %p387, %s23, 1
          %s389 = scalar_lea.vmem %s3, %s388
        $region56: #{tpu_custom_call.1} parent=51 // pred_fallthru
          _
      $region52: #{tpu_custom_call.1} parent=5 // pred_fallthru
        _
    $region6: #{tpu_custom_call.1} parent=1 // loop_footer
      %s16 = sadd.s32 1, %s12
    $region7: #{tpu_custom_call.1} parent=1 // loop_footer_branch
      %11 = sbr.rel target = $region3
    $region8: #{tpu_custom_call.1} parent=1 // loop_exit
      _
    %390 = vsyncpa [#allocation4], 1
    %s391 = scalar_lea.sflag [#allocation4], 1
    %392 = vsyncpa %s391, 1

</llo_original>
